<compile_context>
chip_gen: v5e
topology: v5e:2x2
jax: 0.10.0
libtpu: 0.0.40
codegen_flags: <defaults>
</compile_context>

<pallas_src>
import functools

import jax
import jax.numpy as jnp
from jax.experimental import pallas as pl
from jax.experimental.pallas import tpu as pltpu


def _encoder_kernel(x_ref, w_ref, b_ref, o_ref):
    # Cast the freshly DMA'd x tile to the compute dtype (no-op for f32), run
    # one MXU GEMM with f32 accumulation, add the bias on the VPU, store.
    x = x_ref[...].astype(w_ref.dtype)
    y = jnp.dot(x, w_ref[...], preferred_element_type=jnp.float32)
    o_ref[...] = (y + b_ref[...]).astype(o_ref.dtype)


def prepare_encoder(params, *, pack_lanes=128, compute_dtype=jnp.float32):
    """One-time prep: fold the Linear stack and build the lane-dense operands.

    params: list of (w, b), w as [in_features, out_features], b as [1, out].
    Returns (w_bd, b_tl):
      w_bd: [pack*data_size, pack*z_size] block-diagonal fused weight
      b_tl: [1, pack*z_size] tiled fused bias (f32)
    Call once per parameter set; the results are reused by every forward call.
    """
    # Algebraic fusion of the whole Linear stack (exact: the reference module
    # never applies its ReLU).
    w_f, b_f = params[0]
    b_f = jnp.reshape(b_f, (1, -1))
    for w, b in params[1:]:
        b_f = b_f @ w + jnp.reshape(b, (1, -1))
        w_f = w_f @ w
    data_size, z_size = w_f.shape

    # Lane-dense packing: fold `pack` batch rows per stored row so the output
    # last dim is >= pack_lanes (unmasked vst) and input loads are dense.
    # kron(I_pack, W_fused) is exact (off-diagonal zeros contribute 0).
    pack = 1 if z_size >= pack_lanes else -(-pack_lanes // z_size)
    w_bd = jnp.kron(jnp.eye(pack, dtype=w_f.dtype), w_f).astype(compute_dtype)
    b_tl = jnp.tile(b_f.reshape(1, z_size), (1, pack)).astype(jnp.float32)
    return jax.block_until_ready(w_bd), jax.block_until_ready(b_tl)


@functools.partial(jax.jit, static_argnames=("block_b", "out_dtype"))
def encoder_forward(x, w_bd, b_tl, *, block_b=8192, out_dtype=None):
    """Fused encoder forward.

    x:     [B, data_size]
    w_bd:  [pack*data_size, pack*z_size]  (from prepare_encoder)
    b_tl:  [1, pack*z_size]               (from prepare_encoder)
    Returns [B, z_size] in out_dtype (default: x.dtype).
    """
    B, data_size = x.shape
    kd, kn = w_bd.shape
    pack = kd // data_size
    z_size = kn // pack
    out_dtype = jnp.dtype(x.dtype) if out_dtype is None else jnp.dtype(out_dtype)

    # Pack `pack` batch rows per stored row.  The reshape is layout-preserving
    # (free); the pad copy only triggers when B % pack != 0 — keep B a multiple
    # of `pack` (8 for z_size=16) to avoid it.
    pad = (-B) % pack
    x_p = jnp.pad(x, ((0, pad), (0, 0))) if pad else x
    Bp = B + pad
    rows = Bp // pack
    x_packed = x_p.reshape(rows, kd)          # native dtype; cast happens in-kernel

    # Batch tiling: biggest tile that respects the (8,128) rule, capped so the
    # grid has >= 2 "parallel" steps when possible (v7x megacore).
    if rows <= 8:
        block_rows = rows                      # full dim -> always legal
    else:
        block_rows = min(block_b // pack, rows)
        block_rows = max(8, (block_rows // 8) * 8)
        if rows >= 16:
            block_rows = min(block_rows, max(8, (rows // 2 // 8) * 8))
    grid = (pl.cdiv(rows, block_rows),)

    cost = pl.CostEstimate(
        flops=2 * Bp * data_size * z_size,     # true FLOPs (no kron zero blocks)
        transcendentals=0,
        bytes_accessed=(rows * kd * x.dtype.itemsize       # x (in-kernel dtype)
                        + kd * kn * w_bd.dtype.itemsize     # resident weight
                        + kn * 4                            # bias (f32)
                        + rows * kn * out_dtype.itemsize),  # y
    )

    out_packed = pl.pallas_call(
        _encoder_kernel,
        out_shape=jax.ShapeDtypeStruct((rows, kn), out_dtype),
        grid_spec=pltpu.PrefetchScalarGridSpec(
            num_scalar_prefetch=0,
            grid=grid,
            in_specs=[
                # batch tile of the packed inputs (lane-dense loads)
                pl.BlockSpec((block_rows, kd), lambda i: (i, 0)),
                # fused block-diagonal weight: small, constant index -> resident
                pl.BlockSpec((kd, kn), lambda i: (0, 0)),
                # tiled fused bias (f32)
                pl.BlockSpec((1, kn), lambda i: (0, 0)),
            ],
            out_specs=pl.BlockSpec((block_rows, kn), lambda i: (i, 0)),
        ),
        compiler_params=pltpu.CompilerParams(
            # batch axis is embarrassingly parallel -> megacore sharding on v7x
            dimension_semantics=("parallel",),
        ),
        cost_estimate=cost,
    )(x_packed, w_bd, b_tl)

    out = out_packed.reshape(Bp, z_size)
    return out[:B] if pad else out


def init_encoder_params(key, data_size, z_size, hidden_sizes=(112,)):
    """nn.Linear-style init U(-1/sqrt(in), 1/sqrt(in)); w stored as [in, out]."""
    layer_sizes = list(hidden_sizes) + [z_size]
    params = []
    prev = data_size
    for out in layer_sizes:
        key, kw, kb = jax.random.split(key, 3)
        bound = 1.0 / jnp.sqrt(prev)
        w = jax.random.uniform(kw, (prev, out), jnp.float32, -bound, bound)
        b = jax.random.uniform(kb, (1, out), jnp.float32, -bound, bound)
        params.append((w, b))
        prev = out
    return params


if __name__ == "__main__":
    # Small shapes consistent with the module's forward: [batch, data_size].
    batch = 128          # multiple of pack=8 -> no pad copy; rows=16 -> 2-step grid
    data_size = 32
    z_size = 16
    hidden_sizes = (112,)  # module default

    key = jax.random.PRNGKey(0)
    key, kx = jax.random.split(key)
    x = jax.random.normal(kx, (batch, data_size), dtype=jnp.float32)
    params = init_encoder_params(key, data_size, z_size, hidden_sizes)

    # One-time prep (hoisted out of the per-call path).
    w_bd_f32, b_tl = prepare_encoder(params, compute_dtype=jnp.float32)
    w_bd_bf16, _ = prepare_encoder(params, compute_dtype=jnp.bfloat16)

    # Exact-dtype path (f32 operands, f32 accumulation).
    out_f32 = encoder_forward(x, w_bd_f32, b_tl)
    out_f32 = jax.block_until_ready(out_f32)

    # Opt-in bf16-weight path (f32 x cast in-kernel, f32 accumulation).
    out_bf16 = encoder_forward(x, w_bd_bf16, b_tl)
    out_bf16 = jax.block_until_ready(out_bf16)

    # Plain-JAX reference of the original module's math (Linear -> Linear, no ReLU).
    ref = x
    for w, b in params:
        ref = ref @ w + b

    assert out_f32.shape == (batch, z_size)
    assert out_bf16.shape == (batch, z_size)
    assert jnp.allclose(out_f32, ref, atol=1e-3, rtol=1e-3), \
        float(jnp.max(jnp.abs(out_f32 - ref)))
    assert jnp.allclose(out_bf16.astype(jnp.float32), ref, atol=2e-2, rtol=2e-2), \
        float(jnp.max(jnp.abs(out_bf16.astype(jnp.float32) - ref)))

    print("KERNEL_OK")
</pallas_src>

<mosaic_0001>
module attributes {stable_mosaic.version = 11 : i64} {
  func.func @_encoder_kernel(%arg0: i32, %arg1: memref<8x256xf32, #tpu.memory_space<vmem>>, %arg2: memref<256x128xf32, #tpu.memory_space<vmem>>, %arg3: memref<1x128xf32, #tpu.memory_space<vmem>>, %arg4: memref<8x128xf32, #tpu.memory_space<vmem>>) attributes {dimension_semantics = [#tpu.dimension_semantics<parallel>], iteration_bounds = array<i64: 2>, scalar_prefetch = 0 : i64, scratch_operands = 0 : i64, tpu.core_type = #tpu.core_type<tc>, window_params = [{transform_indices = @transform_0, window_bounds = array<i64: 8, 256>}, {pipeline_mode = #tpu.pipeline_mode<synchronous>, transform_indices = @transform_1, window_bounds = array<i64: 256, 128>}, {pipeline_mode = #tpu.pipeline_mode<synchronous>, transform_indices = @transform_2, window_bounds = array<i64: 1, 128>}, {transform_indices = @transform_3, window_bounds = array<i64: 8, 128>}]} {
    %c0 = arith.constant 0 : index
    %c0_0 = arith.constant 0 : index
    %0 = vector.load %arg1[%c0, %c0_0] : memref<8x256xf32, #tpu.memory_space<vmem>>, vector<8x256xf32>
    %c0_1 = arith.constant 0 : index
    %c0_2 = arith.constant 0 : index
    %1 = vector.load %arg2[%c0_1, %c0_2] : memref<256x128xf32, #tpu.memory_space<vmem>>, vector<256x128xf32>
    %cst = arith.constant dense<0.000000e+00> : vector<8x128xf32>
    %2 = tpu.matmul %0, %1, %cst {dimension_numbers = #tpu.dot_dimension_numbers<[1], [0], [0], [1], [0, 0, 1, 1], [], []>} : vector<8x256xf32>, vector<256x128xf32>, vector<8x128xf32> -> vector<8x128xf32>
    %c0_3 = arith.constant 0 : index
    %c0_4 = arith.constant 0 : index
    %3 = vector.load %arg3[%c0_3, %c0_4] : memref<1x128xf32, #tpu.memory_space<vmem>>, vector<1x128xf32>
    %4 = vector.broadcast %3 : vector<1x128xf32> to vector<8x128xf32>
    %5 = arith.addf %2, %4 : vector<8x128xf32>
    %c0_5 = arith.constant 0 : index
    %c0_6 = arith.constant 0 : index
    %6 = vector.load %arg4[%c0_5, %c0_6] : memref<8x128xf32, #tpu.memory_space<vmem>>, vector<8x128xf32>
    tpu.vector_store %arg4[%c0_5, %c0_6], %5 {strides = array<i32>} : memref<8x128xf32, #tpu.memory_space<vmem>>, vector<8x128xf32>,
    return
  }
  func.func @transform_0(%arg0: i32) -> (i32, i32) {
    %c0_i32 = arith.constant 0 : i32
    %c0_i32_0 = arith.constant 0 : i32
    return %arg0, %c0_i32 : i32, i32
  }
  func.func @transform_1(%arg0: i32) -> (i32, i32) {
    %c0_i32 = arith.constant 0 : i32
    %c0_i32_0 = arith.constant 0 : i32
    %c0_i32_1 = arith.constant 0 : i32
    return %c0_i32, %c0_i32_0 : i32, i32
  }
  func.func @transform_2(%arg0: i32) -> (i32, i32) {
    %c0_i32 = arith.constant 0 : i32
    %c0_i32_0 = arith.constant 0 : i32
    %c0_i32_1 = arith.constant 0 : i32
    return %c0_i32, %c0_i32_0 : i32, i32
  }
  func.func @transform_3(%arg0: i32) -> (i32, i32) {
    %c0_i32 = arith.constant 0 : i32
    %c0_i32_0 = arith.constant 0 : i32
    return %arg0, %c0_i32 : i32, i32
  }
}

</mosaic_0001>

<llo_original>
// kernel: encoder_forward.1
$region0: #{encoder_forward.1}
  #allocation0 [shape = 'u32[]', space=smem, size = 0x4, offset = 0x4, fixed_abs, tag = 'smem constant byte address 0x4 - core index']
  #allocation1 [shape = 'u32[72,128]{1,0:T(1,128)}', space=vmem, size = 0x9000, scoped, tag = 'internal scratch']
  %s0 = inlined_call_operand.vmem [shape: f32[16,256], index: 0, kind: input, shape index: {}]
  %s1 = inlined_call_operand.vmem [shape: f32[256,128], index: 1, kind: input, shape index: {}]
  %s2 = inlined_call_operand.vmem [shape: f32[1,128], index: 2, kind: input, shape index: {}]
  %s3 = inlined_call_operand.vmem [shape: f32[16,128], index: 3, kind: output, shape index: {}]
  %s4 = sld [smem:[#allocation0]]
  $region45: #{encoder_forward.1} parent=0
    _
  %s6 = ssub.s32 1, %s4
  %s7 = scalar_select 0, %s6, %s4
  loop: start=0, step=1, limit=4
  $region2: #{encoder_forward.1} parent=0 // loop_pre_header
    _
  $region3: #{encoder_forward.1} parent=0 // loop_header
    %s9 = sphi 0, %s13
    %p10 = scmp.ge.s32.totalorder %s9, 4
    %s19 = sphi 0, %s21
    %s22 = sphi 0, %s19
    %s23 = sphi 0, %s22
    %s39 = sphi 0, %s23
    %s43 = sphi 0, %s43
    %s45 = sphi 0, %s43
    %s46 = sphi 0, %s45
    %s60 = sphi 0, %s46
    %s64 = sphi 0, %s64
    %s66 = sphi 0, %s64
    %s67 = sphi 0, %s66
    %s81 = sphi 0, %s67
    %s87 = sphi 0, %s89
    %s90 = sphi 0, %s87
    %s91 = sphi 0, %s90
    %s107 = sphi 0, %s91
  $region4: #{encoder_forward.1} parent=0 // loop_header_branch
    %12 = sbr.rel (%p10) target = $region8
  $region5: #{encoder_forward.1} parent=0 // loop_body
    %s14 = ssub.s32 %s9, 1
    %s15 = ssub.s32 %s9, 2
    %s16 = sadd.s32 %s9, 1
    %s17 = ssub.s32 %s9, %s16
    %p18 = scmp.eq.s32.totalorder %s17, 0
    %s20 = sadd.s32 %s19, 1
    %s21 = scalar_select %p18, %s19, %s20
    %p24 = pneg %p18
    %p25 = scmp.eq.s32.totalorder %s9, 1
    %p26 = por %p24, %p25
    %p27 = scmp.ne.s32.totalorder %s19, %s22
    %p28 = scmp.eq.s32.totalorder %s9, 0
    %p29 = por %p27, %p28
    %p30 = scmp.ne.s32.totalorder %s19, %s22
    %p31 = scmp.eq.s32.totalorder %s14, 1
    %p32 = por %p30, %p31
    %p33 = scmp.ne.s32.totalorder %s22, %s23
    %p34 = scmp.eq.s32.totalorder %s14, 0
    %p35 = por %p33, %p34
    %p36 = scmp.ne.s32.totalorder %s22, %s23
    %p37 = scmp.eq.s32.totalorder %s15, 1
    %p38 = por %p36, %p37
    %p40 = scmp.ne.s32.totalorder %s23, %s39
    %p41 = scmp.eq.s32.totalorder %s15, 0
    %p42 = por %p40, %p41
    %s44 = sadd.s32 %s43, 1
    %p47 = scmp.eq.s32.totalorder %s9, 1
    %p48 = scmp.ne.s32.totalorder %s43, %s45
    %p49 = scmp.eq.s32.totalorder %s9, 0
    %p50 = por %p48, %p49
    %p51 = scmp.ne.s32.totalorder %s43, %s45
    %p52 = scmp.eq.s32.totalorder %s14, 1
    %p53 = por %p51, %p52
    %p54 = scmp.ne.s32.totalorder %s45, %s46
    %p55 = scmp.eq.s32.totalorder %s14, 0
    %p56 = por %p54, %p55
    %p57 = scmp.ne.s32.totalorder %s45, %s46
    %p58 = scmp.eq.s32.totalorder %s15, 1
    %p59 = por %p57, %p58
    %p61 = scmp.ne.s32.totalorder %s46, %s60
    %p62 = scmp.eq.s32.totalorder %s15, 0
    %p63 = por %p61, %p62
    %s65 = sadd.s32 %s64, 1
    %p68 = scmp.eq.s32.totalorder %s9, 1
    %p69 = scmp.ne.s32.totalorder %s64, %s66
    %p70 = scmp.eq.s32.totalorder %s9, 0
    %p71 = por %p69, %p70
    %p72 = scmp.ne.s32.totalorder %s64, %s66
    %p73 = scmp.eq.s32.totalorder %s14, 1
    %p74 = por %p72, %p73
    %p75 = scmp.ne.s32.totalorder %s66, %s67
    %p76 = scmp.eq.s32.totalorder %s14, 0
    %p77 = por %p75, %p76
    %p78 = scmp.ne.s32.totalorder %s66, %s67
    %p79 = scmp.eq.s32.totalorder %s15, 1
    %p80 = por %p78, %p79
    %p82 = scmp.ne.s32.totalorder %s67, %s81
    %p83 = scmp.eq.s32.totalorder %s15, 0
    %p84 = por %p82, %p83
    %s85 = ssub.s32 %s9, %s16
    %p86 = scmp.eq.s32.totalorder %s85, 0
    %s88 = sadd.s32 %s87, 1
    %s89 = scalar_select %p86, %s87, %s88
    %p92 = pneg %p86
    %p93 = scmp.eq.s32.totalorder %s9, 1
    %p94 = por %p92, %p93
    %p95 = scmp.ne.s32.totalorder %s87, %s90
    %p96 = scmp.eq.s32.totalorder %s9, 0
    %p97 = por %p95, %p96
    %p98 = scmp.ne.s32.totalorder %s87, %s90
    %p99 = scmp.eq.s32.totalorder %s14, 1
    %p100 = por %p98, %p99
    %p101 = scmp.ne.s32.totalorder %s90, %s91
    %p102 = scmp.eq.s32.totalorder %s14, 0
    %p103 = por %p101, %p102
    %p104 = scmp.ne.s32.totalorder %s90, %s91
    %p105 = scmp.eq.s32.totalorder %s15, 1
    %p106 = por %p104, %p105
    %p108 = scmp.ne.s32.totalorder %s91, %s107
    %p109 = scmp.eq.s32.totalorder %s15, 0
    %p110 = por %p108, %p109
    %p111 = scmp.le.s32.totalorder 1, %s9
    %p112 = scmp.lt.s32.totalorder %s9, 3
    %p113 = pnand %p111, %p112
    %p114 = pneg %p113
    // Predicated region
    $region9: #{encoder_forward.1} parent=5 // pred_check
      _
    $region10: #{encoder_forward.1} parent=5 // pred_check_branch
      %116 = sbr.rel (%p113) target = $region12
    $region11: #{encoder_forward.1} parent=5 // pred_region
      %s117 = ssub.s32 %s9, 1
      // Predicated region
      $region13: #{encoder_forward.1} parent=11 // pred_check
        %p118 = pneg %p56
      $region14: #{encoder_forward.1} parent=11 // pred_check_branch
        %120 = sbr.rel (%p118) target = $region16
      $region15: #{encoder_forward.1} parent=11 // pred_region
        _
      $region16: #{encoder_forward.1} parent=11 // pred_fallthru
        _
      // Predicated region
      $region17: #{encoder_forward.1} parent=11 // pred_check
        %p121 = pneg %p77
      $region18: #{encoder_forward.1} parent=11 // pred_check_branch
        %123 = sbr.rel (%p121) target = $region20
      $region19: #{encoder_forward.1} parent=11 // pred_region
        _
      $region20: #{encoder_forward.1} parent=11 // pred_fallthru
        _
    $region12: #{encoder_forward.1} parent=5 // pred_fallthru
      _
    %p124 = scmp.lt.s32.totalorder %s9, 2
    // Predicated region
    $region21: #{encoder_forward.1} parent=5 // pred_check
      %p125 = pneg %p124
    $region22: #{encoder_forward.1} parent=5 // pred_check_branch
      %127 = sbr.rel (%p125) target = $region24
    $region23: #{encoder_forward.1} parent=5 // pred_region
      // Predicated region
      $region25: #{encoder_forward.1} parent=23 // pred_check
        %p128 = pneg %p29
      $region26: #{encoder_forward.1} parent=23 // pred_check_branch
        %130 = sbr.rel (%p128) target = $region28
      $region27: #{encoder_forward.1} parent=23 // pred_region
        %p131 = scmp.lt.s32.totalorder %s9, 1
        %s132 = scalar_select %p131, %s9, 1
        %s133 = smul.addr %s132, 2
        %s134 = smul.addr %s133, 8
        %s135 = scalar_lea.vmem %s0, %s134
      $region28: #{encoder_forward.1} parent=23 // pred_fallthru
        _
    $region24: #{encoder_forward.1} parent=5 // pred_fallthru
      _
    %p136 = scmp.le.s32.totalorder 1, %s9
    %p137 = scmp.lt.s32.totalorder %s9, 3
    %p138 = pnand %p136, %p137
    %p139 = pneg %p138
    // Predicated region
    $region29: #{encoder_forward.1} parent=5 // pred_check
      _
    $region30: #{encoder_forward.1} parent=5 // pred_check_branch
      %141 = sbr.rel (%p138) target = $region32
    $region31: #{encoder_forward.1} parent=5 // pred_region
      %s142 = ssub.s32 %s9, 1
      %p143 = scmp.lt.s32.totalorder %s14, 1
      %s144 = scalar_select %p143, %s14, 1
      %s145 = smul.addr %s144, 2
      %s146 = smul.addr %s145, 8
      %s147 = scalar_lea.vmem %s0, %s146
      %p148 = pneg %p35
      %p149 = pneg %p32
      %p150 = pneg %p56
      %p151 = pneg %p53
      %p152 = pneg %p77
      %p153 = pneg %p74
      %p154 = pneg %p103
      %p155 = pneg %p100
      %p156 = scmp.lt.s32.totalorder %s14, 1
      %s157 = scalar_select %p156, %s14, 1
      %s158 = smul.addr %s157, 8
      %s159 = scalar_lea.vmem %s3, %s158
      %p160 = scmp.lt.s32.totalorder %s14, 1
      %s161 = scalar_select %p160, %s14, 1
      %s162 = smul.addr %s161, 2
      %s163 = smul.addr %s162, 8
      %s164 = scalar_lea.vmem %s0, %s163
      %p165 = scmp.lt.s32.totalorder %s14, 1
      %s166 = scalar_select %p165, %s14, 1
      %s167 = smul.addr %s166, 8
      %s168 = scalar_lea.vmem %s3, %s167
      %v169 = vld [vmem:[%s164] sm:$0xff]
      %v170 = vld [vmem:[%s164 + $0x8] sm:$0xff]
      %v171 = vld [vmem:[%s1] sm:$0xff]
      %v172 = vld [vmem:[%s1 + $0x8] sm:$0xff]
      %v173 = vld [vmem:[%s1 + $0x10] sm:$0xff]
      %v174 = vld [vmem:[%s1 + $0x18] sm:$0xff]
      %v175 = vld [vmem:[%s1 + $0x20] sm:$0xff]
      %v176 = vld [vmem:[%s1 + $0x28] sm:$0xff]
      %v177 = vld [vmem:[%s1 + $0x30] sm:$0xff]
      %v178 = vld [vmem:[%s1 + $0x38] sm:$0xff]
      %v179 = vld [vmem:[%s1 + $0x40] sm:$0xff]
      %v180 = vld [vmem:[%s1 + $0x48] sm:$0xff]
      %v181 = vld [vmem:[%s1 + $0x50] sm:$0xff]
      %v182 = vld [vmem:[%s1 + $0x58] sm:$0xff]
      %v183 = vld [vmem:[%s1 + $0x60] sm:$0xff]
      %v184 = vld [vmem:[%s1 + $0x68] sm:$0xff]
      %v185 = vld [vmem:[%s1 + $0x70] sm:$0xff]
      %v186 = vld [vmem:[%s1 + $0x78] sm:$0xff]
      %v187 = vld [vmem:[%s1 + $0x80] sm:$0xff]
      %v188 = vld [vmem:[%s1 + $0x88] sm:$0xff]
      %v189 = vld [vmem:[%s1 + $0x90] sm:$0xff]
      %v190 = vld [vmem:[%s1 + $0x98] sm:$0xff]
      %v191 = vld [vmem:[%s1 + $0xa0] sm:$0xff]
      %v192 = vld [vmem:[%s1 + $0xa8] sm:$0xff]
      %v193 = vld [vmem:[%s1 + $0xb0] sm:$0xff]
      %v194 = vld [vmem:[%s1 + $0xb8] sm:$0xff]
      %v195 = vld [vmem:[%s1 + $0xc0] sm:$0xff]
      %v196 = vld [vmem:[%s1 + $0xc8] sm:$0xff]
      %v197 = vld [vmem:[%s1 + $0xd0] sm:$0xff]
      %v198 = vld [vmem:[%s1 + $0xd8] sm:$0xff]
      %v199 = vld [vmem:[%s1 + $0xe0] sm:$0xff]
      %v200 = vld [vmem:[%s1 + $0xe8] sm:$0xff]
      %v201 = vld [vmem:[%s1 + $0xf0] sm:$0xff]
      %v202 = vld [vmem:[%s1 + $0xf8] sm:$0xff]
      %v203 = vld [vmem:[%s2] sm:$0x1]
      %v205 = vperm.slane %v203, 0
      %207 = vmatpush.msra.mxu0 %v186
      %208 = vmatpush.msra.mxu0 %v185
      %209 = vmatpush.msra.mxu0 %v184
      %210 = vmatpush.msra.mxu0 %v183
      %211 = vmatpush.msra.mxu0 %v182
      %212 = vmatpush.msra.mxu0 %v181
      %213 = vmatpush.msra.mxu0 %v180
      %214 = vmatpush.msra.mxu0 %v179
      %215 = vmatpush.msra.mxu0 %v178
      %216 = vmatpush.msra.mxu0 %v177
      %217 = vmatpush.msra.mxu0 %v176
      %218 = vmatpush.msra.mxu0 %v175
      %219 = vmatpush.msra.mxu0 %v174
      %220 = vmatpush.msra.mxu0 %v173
      %221 = vmatpush.msra.mxu0 %v172
      %222 = vmatpush.msra.mxu0 %v171
      %223 = vmatmul.f32.gmra.mxu0 %v169
      %v224 = vpop.f32.mrf.mxu0
      %v225 = vadd.f32 %v205, %v224
      %226 = vdwg.mxu0
      %227 = vmatpush.msra.mxu0 %v202
      %228 = vmatpush.msra.mxu0 %v201
      %229 = vmatpush.msra.mxu0 %v200
      %230 = vmatpush.msra.mxu0 %v199
      %231 = vmatpush.msra.mxu0 %v198
      %232 = vmatpush.msra.mxu0 %v197
      %233 = vmatpush.msra.mxu0 %v196
      %234 = vmatpush.msra.mxu0 %v195
      %235 = vmatpush.msra.mxu0 %v194
      %236 = vmatpush.msra.mxu0 %v193
      %237 = vmatpush.msra.mxu0 %v192
      %238 = vmatpush.msra.mxu0 %v191
      %239 = vmatpush.msra.mxu0 %v190
      %240 = vmatpush.msra.mxu0 %v189
      %241 = vmatpush.msra.mxu0 %v188
      %242 = vmatpush.msra.mxu0 %v187
      %243 = vmatmul.f32.gmra.mxu0 %v170
      %v244 = vpop.f32.mrf.mxu0
      %v245 = vadd.f32 %v225, %v244
      %246 = vdwg.mxu0
      %247 = vst [vmem:[%s168] sm:$0xff] %v245
      %p248 = scmp.lt.s32.totalorder %s14, 1
      %s249 = scalar_select %p248, %s14, 1
      %s250 = smul.addr %s249, 8
      %s251 = scalar_lea.vmem %s3, %s250
      // Predicated region
      $region33: #{encoder_forward.1} parent=31 // pred_check
        %p252 = pneg %p100
      $region34: #{encoder_forward.1} parent=31 // pred_check_branch
        %254 = sbr.rel (%p252) target = $region36
      $region35: #{encoder_forward.1} parent=31 // pred_region
        _
      $region36: #{encoder_forward.1} parent=31 // pred_fallthru
        _
    $region32: #{encoder_forward.1} parent=5 // pred_fallthru
      _
    %p255 = scmp.le.s32.totalorder 2, %s9
    // Predicated region
    $region37: #{encoder_forward.1} parent=5 // pred_check
      %p256 = pneg %p255
    $region38: #{encoder_forward.1} parent=5 // pred_check_branch
      %258 = sbr.rel (%p256) target = $region40
    $region39: #{encoder_forward.1} parent=5 // pred_region
      %s259 = ssub.s32 %s9, 2
      // Predicated region
      $region41: #{encoder_forward.1} parent=39 // pred_check
        %p260 = pneg %p106
      $region42: #{encoder_forward.1} parent=39 // pred_check_branch
        %262 = sbr.rel (%p260) target = $region44
      $region43: #{encoder_forward.1} parent=39 // pred_region
        %p263 = scmp.lt.s32.totalorder %s15, 1
        %s264 = scalar_select %p263, %s15, 1
        %s265 = smul.addr %s264, 8
        %s266 = scalar_lea.vmem %s3, %s265
      $region44: #{encoder_forward.1} parent=39 // pred_fallthru
        _
    $region40: #{encoder_forward.1} parent=5 // pred_fallthru
      _
  $region6: #{encoder_forward.1} parent=0 // loop_footer
    %s13 = sadd.s32 1, %s9
  $region7: #{encoder_forward.1} parent=0 // loop_footer_branch
    %8 = sbr.rel target = $region3
  $region8: #{encoder_forward.1} parent=0 // loop_exit
    _

</llo_original>
